<compile_context>
chip_gen: v6e
topology: v6e:2x2x1
jax: 0.10.0
libtpu: 0.0.40
codegen_flags: <defaults>
</compile_context>

<pallas_src>
import jax
import jax.numpy as jnp
from jax.experimental import pallas as pl
from jax.experimental.pallas import tpu as pltpu

BN_EPS = 1e-5


def _round_up(x, m):
    return ((x + m - 1) // m) * m


def _physical_vmem_bytes():
    """Per-TensorCore VMEM capacity; conservative fallback if query fails."""
    try:
        info = pltpu.get_tpu_info()
        cap = getattr(info, "vmem_capacity_bytes", None)
        if cap:
            return int(cap)
    except Exception:
        pass
    return 64 * 1024 * 1024  # v7x per-TC VMEM (most restrictive generation)


def _vmem_footprint(block_b, in_p, tile_h, n_p, n_h_tiles):
    """Rough per-TC VMEM bytes for one tiling choice."""
    wbuf = 1 if n_h_tiles == 1 else 2          # Buffered(1) when grid-invariant
    x_bytes   = 2 * block_b * in_p * 4         # double-buffered x tile, f32 worst case
    w1_bytes  = wbuf * in_p * tile_h * 2       # bf16
    b1_bytes  = wbuf * tile_h * 4
    w2_bytes  = wbuf * tile_h * n_p * 2        # bf16
    b2_bytes  = n_p * 4
    out_bytes = 2 * block_b * n_p * 4          # double-buffered output tile
    acc_bytes = block_b * n_p * 4              # f32 accumulator scratch
    interm    = block_b * tile_h * 8           # h1 (f32) + bf16 activation working set
    return (x_bytes + w1_bytes + b1_bytes + w2_bytes + b2_bytes
            + out_bytes + acc_bytes + interm)


def _choose_tiling(B, in_p, h_p, n_p, budget, block_b=None, tile_h=None):
    """Pick (block_b, tile_h): prefer large batch tiles, tile hidden dim to fit VMEM."""
    if block_b is not None:
        cand_b = [max(16, _round_up(block_b, 16))]
    else:
        b_cap = min(512, _round_up(B, 16))
        cand_b = [b for b in (512, 256, 128, 64, 32, 16) if b <= b_cap] or [16]
    if tile_h is not None:
        assert tile_h % 128 == 0 and h_p % tile_h == 0, "tile_h must divide padded hidden dim"
        cand_h = [tile_h]
    else:
        cand_h = sorted({t for t in (h_p, 2048, 1024, 512, 256, 128)
                         if t <= h_p and h_p % t == 0}, reverse=True)
    for bb in cand_b:
        for th in cand_h:
            if _vmem_footprint(bb, in_p, th, n_p, h_p // th) <= budget:
                return bb, th
    return cand_b[-1], cand_h[-1]


# --------------------------------------------------------------------------- kernel

def _mlp_head_kernel(x_ref, w1_ref, b1_ref, w2_ref, b2_ref, o_ref, acc_ref):
    hj = pl.program_id(1)

    @pl.when(hj == 0)
    def _():
        acc_ref[...] = jnp.zeros_like(acc_ref)

    # ---- Linear 1 (BN folded into W1'/b1'): bf16 MXU operands, f32 accumulate ----
    # In-kernel bf16 cast of the x tile (no separate wrapper pre-pass over HBM).
    x = x_ref[...].astype(jnp.bfloat16)                                   # (TB, in_p)
    h1 = jnp.dot(x, w1_ref[...], preferred_element_type=jnp.float32) + b1_ref[...]

    # ---- ReLU in f32 (v5e VPU has no bf16). Dropout: identity in eval mode. ----
    a = jnp.maximum(h1, 0.0)

    # ---- Partial Linear 2 over this hidden tile; accumulate in f32 VMEM scratch ----
    acc_ref[...] += jnp.dot(a.astype(jnp.bfloat16), w2_ref[...],
                            preferred_element_type=jnp.float32)

    @pl.when(hj == pl.num_programs(1) - 1)
    def _():
        o_ref[...] = (acc_ref[...] + b2_ref[...]).astype(o_ref.dtype)


# --------------------------------------------------------------------------- wrapper

def prepare_params(params, bn_eps=BN_EPS):
    """Fold BN into Linear1, pad (in_dim, h, n) to lane multiples, cast MXU operands to bf16.

    Call ONCE per model; the returned dict is reused by every mlp_head_forward call so
    the fold/pad/cast HBM passes never happen per forward.
    """
    w1t = params["w1t"]                      # (in_dim, h)
    w2t = params["w2t"]                      # (h, n_classes)
    in_dim, h = w1t.shape
    n_classes = w2t.shape[1]

    scale = params["gamma"] * jax.lax.rsqrt(params["running_var"] + bn_eps)   # (h,)
    w1f = w1t * scale[None, :]
    b1f = (params["b1"] - params["running_mean"]) * scale + params["beta"]

    in_p = _round_up(in_dim, 128)
    h_p = _round_up(h, 128)
    n_p = _round_up(n_classes, 128)

    w1f = jnp.pad(w1f, ((0, in_p - in_dim), (0, h_p - h))).astype(jnp.bfloat16)   # (in_p, h_p)
    b1f = jnp.pad(b1f, (0, h_p - h)).reshape(1, h_p).astype(jnp.float32)          # (1, h_p)
    w2p = jnp.pad(w2t, ((0, h_p - h), (0, n_p - n_classes))).astype(jnp.bfloat16) # (h_p, n_p)
    b2p = jnp.pad(params["b2"], (0, n_p - n_classes)).reshape(1, n_p).astype(jnp.float32)

    return {"w1f": w1f, "b1f": b1f, "w2p": w2p, "b2p": b2p,
            "in_dim": in_dim, "n_classes": n_classes,
            "in_p": in_p, "h_p": h_p, "n_p": n_p}


def mlp_head_forward(x, prepared, *, block_b=None, tile_h=None,
                     vmem_limit_bytes=None, out_dtype=jnp.float32,
                     return_padded=False):
    """x: (B, in_dim) float32. prepared: output of prepare_params()."""
    B, in_dim = x.shape
    assert in_dim == prepared["in_dim"], "x feature dim does not match prepared params"
    in_p, h_p, n_p = prepared["in_p"], prepared["h_p"], prepared["n_p"]
    n_classes = prepared["n_classes"]

    # ---- per-generation VMEM budget (v5e/v6e 128 MiB, v7x 64 MiB per TC) ----
    phys = _physical_vmem_bytes()
    if vmem_limit_bytes is None:
        vmem_limit_bytes = int(phys * 0.9)
    tiling_budget = min(int(phys * 0.6), int(vmem_limit_bytes * 2 // 3))

    block_b, tile_h = _choose_tiling(B, in_p, h_p, n_p, tiling_budget,
                                     block_b=block_b, tile_h=tile_h)
    B_p = _round_up(B, block_b)
    n_h = h_p // tile_h
    grid = (B_p // block_b, n_h)

    if B_p != B or in_p != in_dim:
        # A copy is unavoidable; fuse the zero-pad with the bf16 cast so both the padded
        # copy's writeback and the kernel-side x DMA are halved.
        x_in = jnp.pad(x, ((0, B_p - B), (0, in_p - in_dim))).astype(jnp.bfloat16)
    else:
        x_in = x  # keep f32 in HBM; kernel casts the tile in VMEM under MXU slack

    # Single-buffer operands that never change across the grid (constant index_map).
    def _spec(shape, imap, *, invariant=False):
        if invariant:
            return pl.BlockSpec(shape, imap, pipeline_mode=pl.Buffered(1))
        return pl.BlockSpec(shape, imap)

    w_invariant = (n_h == 1)   # with a single hidden tile the weights are grid-invariant

    out = pl.pallas_call(
        _mlp_head_kernel,
        out_shape=jax.ShapeDtypeStruct((B_p, n_p), out_dtype),
        grid_spec=pltpu.PrefetchScalarGridSpec(
            num_scalar_prefetch=0,
            grid=grid,
            in_specs=[
                _spec((block_b, in_p), lambda i, j: (i, 0)),                        # x tile
                _spec((in_p, tile_h), lambda i, j: (0, j), invariant=w_invariant),  # W1' (BN-folded)
                _spec((1, tile_h), lambda i, j: (0, j), invariant=w_invariant),     # b1'
                _spec((tile_h, n_p), lambda i, j: (j, 0), invariant=w_invariant),   # W2^T
                _spec((1, n_p), lambda i, j: (0, 0), invariant=True),               # b2
            ],
            out_specs=pl.BlockSpec((block_b, n_p), lambda i, j: (i, 0)),
            scratch_shapes=[pltpu.VMEM((block_b, n_p), jnp.float32)],               # f32 accumulator
        ),
        compiler_params=pltpu.CompilerParams(
            dimension_semantics=("parallel", "arbitrary"),   # batch blocks shard across TCs
            vmem_limit_bytes=vmem_limit_bytes,
        ),
    )(x_in, prepared["w1f"], prepared["b1f"], prepared["w2p"], prepared["b2p"])

    if return_padded:
        return out            # (B_p, n_p): avoid the extra slice pass if downstream allows
    return out[:B, :n_classes]


# --------------------------------------------------------------------------- params / refs

def init_params(key, in_dim, n_classes):
    """Deterministic synthetic parameters matching _MLPHead's shapes."""
    h = max(64, in_dim // 2)
    k1, k2, k3, k4, k5, k6 = jax.random.split(key, 6)
    bound1 = 1.0 / jnp.sqrt(in_dim)
    bound2 = 1.0 / jnp.sqrt(h)
    return {
        # nn.Linear(in_dim, h) -> weight (h, in_dim); stored transposed (in_dim, h)
        "w1t": jax.random.uniform(k1, (in_dim, h), jnp.float32, -bound1, bound1),
        "b1": jax.random.uniform(k2, (h,), jnp.float32, -bound1, bound1),
        # nn.BatchNorm1d(h)
        "gamma": jnp.ones((h,), jnp.float32),
        "beta": jnp.zeros((h,), jnp.float32),
        "running_mean": 0.1 * jax.random.normal(k3, (h,), jnp.float32),
        "running_var": 1.0 + 0.05 * jax.random.uniform(k4, (h,), jnp.float32),
        # nn.Linear(h, n_classes) -> weight (n_classes, h); stored transposed (h, n_classes)
        "w2t": jax.random.uniform(k5, (h, n_classes), jnp.float32, -bound2, bound2),
        "b2": jax.random.uniform(k6, (n_classes,), jnp.float32, -bound2, bound2),
    }


def _reference_f32(x, p):
    """Exact eval-mode module math in f32 (loose tolerance vs bf16-operand kernel)."""
    h1 = x @ p["w1t"] + p["b1"]
    bn = (h1 - p["running_mean"]) / jnp.sqrt(p["running_var"] + BN_EPS) * p["gamma"] + p["beta"]
    a = jnp.maximum(bn, 0.0)
    return a @ p["w2t"] + p["b2"]


def _reference_bf16(x, p):
    """Reference reproducing the kernel's bf16 MXU operands + f32 accumulation."""
    scale = p["gamma"] * jax.lax.rsqrt(p["running_var"] + BN_EPS)
    w1f = (p["w1t"] * scale[None, :]).astype(jnp.bfloat16)
    b1f = (p["b1"] - p["running_mean"]) * scale + p["beta"]
    h1 = jnp.dot(x.astype(jnp.bfloat16), w1f, preferred_element_type=jnp.float32) + b1f
    a = jnp.maximum(h1, 0.0)
    return jnp.dot(a.astype(jnp.bfloat16), p["w2t"].astype(jnp.bfloat16),
                   preferred_element_type=jnp.float32) + p["b2"]


if __name__ == "__main__":
    key = jax.random.PRNGKey(0)
    kx, kp, kx2, kp2 = jax.random.split(key, 4)

    # Case 1: tiny head (single hidden tile, Buffered(1) weights, no batch/K padding issues).
    B, in_dim, n_classes = 8, 32, 10               # h = max(64, 32 // 2) = 64
    x = jax.random.normal(kx, (B, in_dim), jnp.float32)
    params = init_params(kp, in_dim, n_classes)
    prepared = prepare_params(params)              # fold/pad/cast ONCE, reused per forward
    out = jax.block_until_ready(mlp_head_forward(x, prepared))
    assert out.shape == (B, n_classes)
    assert jnp.allclose(out, _reference_bf16(x, params), atol=2e-3, rtol=2e-3), \
        "case1 mismatch vs bf16-aware reference"
    assert jnp.allclose(out, _reference_f32(x, params), atol=5e-2, rtol=5e-2), \
        "case1 mismatch vs f32 module reference"

    # Case 2: awkward dims + forced hidden-dim tiling — exercises the "arbitrary" reduction
    # axis, the f32 accumulator epilogue, and batch/feature zero-padding.
    B2, in_dim2, n_classes2 = 37, 300, 7           # h = 150 -> h_p = 256 -> 2 hidden tiles
    x2 = jax.random.normal(kx2, (B2, in_dim2), jnp.float32)
    params2 = init_params(kp2, in_dim2, n_classes2)
    prepared2 = prepare_params(params2)
    out2 = jax.block_until_ready(mlp_head_forward(x2, prepared2, block_b=16, tile_h=128))
    assert out2.shape == (B2, n_classes2)
    assert jnp.allclose(out2, _reference_bf16(x2, params2), atol=3e-3, rtol=3e-3), \
        "case2 mismatch vs bf16-aware reference"
    assert jnp.allclose(out2, _reference_f32(x2, params2), atol=8e-2, rtol=8e-2), \
        "case2 mismatch vs f32 module reference"

    print("KERNEL_OK")
</pallas_src>

<mosaic_0001>
module attributes {stable_mosaic.version = 11 : i64} {
  func.func @_mlp_head_kernel(%arg0: i32, %arg1: i32, %arg2: memref<16x128xbf16, #tpu.memory_space<vmem>>, %arg3: memref<128x128xbf16, #tpu.memory_space<vmem>>, %arg4: memref<1x128xf32, #tpu.memory_space<vmem>>, %arg5: memref<128x128xbf16, #tpu.memory_space<vmem>>, %arg6: memref<1x128xf32, #tpu.memory_space<vmem>>, %arg7: memref<16x128xf32, #tpu.memory_space<vmem>>, %arg8: memref<16x128xf32, #tpu.memory_space<vmem>>) attributes {dimension_semantics = [#tpu.dimension_semantics<parallel>, #tpu.dimension_semantics<arbitrary>], iteration_bounds = array<i64: 1, 1>, scalar_prefetch = 0 : i64, scratch_operands = 1 : i64, tpu.core_type = #tpu.core_type<tc>, window_params = [{transform_indices = @transform_0, window_bounds = array<i64: 16, 128>}, {pipeline_mode = #tpu.pipeline_mode<synchronous>, transform_indices = @transform_1, window_bounds = array<i64: 128, 128>}, {pipeline_mode = #tpu.pipeline_mode<synchronous>, transform_indices = @transform_2, window_bounds = array<i64: 1, 128>}, {pipeline_mode = #tpu.pipeline_mode<synchronous>, transform_indices = @transform_3, window_bounds = array<i64: 128, 128>}, {pipeline_mode = #tpu.pipeline_mode<synchronous>, transform_indices = @transform_4, window_bounds = array<i64: 1, 128>}, {transform_indices = @transform_5, window_bounds = array<i64: 16, 128>}]} {
    %c0_i32 = arith.constant 0 : i32
    %0 = arith.cmpi eq, %arg1, %c0_i32 : i32
    %1 = arith.extui %0 : i1 to i32
    %c0_i32_0 = arith.constant 0 : i32
    %2 = arith.cmpi ne, %1, %c0_i32_0 : i32
    scf.if %2 {
      %cst_16 = arith.constant 0.000000e+00 : f32
      %20 = vector.broadcast %cst_16 : f32 to vector<16x128xf32>
      %c0_17 = arith.constant 0 : index
      %c0_18 = arith.constant 0 : index
      %21 = vector.load %arg8[%c0_17, %c0_18] : memref<16x128xf32, #tpu.memory_space<vmem>>, vector<16x128xf32>
      tpu.vector_store %arg8[%c0_17, %c0_18], %20 {strides = array<i32>} : memref<16x128xf32, #tpu.memory_space<vmem>>, vector<16x128xf32>,
    } else {
    }
    %c0 = arith.constant 0 : index
    %c0_1 = arith.constant 0 : index
    %3 = vector.load %arg2[%c0, %c0_1] : memref<16x128xbf16, #tpu.memory_space<vmem>>, vector<16x128xbf16>
    %c0_2 = arith.constant 0 : index
    %c0_3 = arith.constant 0 : index
    %4 = vector.load %arg3[%c0_2, %c0_3] : memref<128x128xbf16, #tpu.memory_space<vmem>>, vector<128x128xbf16>
    %cst = arith.constant dense<0.000000e+00> : vector<16x128xf32>
    %5 = tpu.matmul %3, %4, %cst {dimension_numbers = #tpu.dot_dimension_numbers<[1], [0], [0], [1], [0, 0, 1, 1], [], []>} : vector<16x128xbf16>, vector<128x128xbf16>, vector<16x128xf32> -> vector<16x128xf32>
    %c0_4 = arith.constant 0 : index
    %c0_5 = arith.constant 0 : index
    %6 = vector.load %arg4[%c0_4, %c0_5] : memref<1x128xf32, #tpu.memory_space<vmem>>, vector<1x128xf32>
    %7 = vector.broadcast %6 : vector<1x128xf32> to vector<16x128xf32>
    %8 = arith.addf %5, %7 : vector<16x128xf32>
    %cst_6 = arith.constant 0.000000e+00 : f32
    %9 = vector.broadcast %cst_6 : f32 to vector<16x128xf32>
    %10 = arith.maximumf %8, %9 : vector<16x128xf32>
    %c0_7 = arith.constant 0 : index
    %c0_8 = arith.constant 0 : index
    %11 = vector.load %arg8[%c0_7, %c0_8] : memref<16x128xf32, #tpu.memory_space<vmem>>, vector<16x128xf32>
    %12 = arith.truncf %10 : vector<16x128xf32> to vector<16x128xbf16>
    %c0_9 = arith.constant 0 : index
    %c0_10 = arith.constant 0 : index
    %13 = vector.load %arg5[%c0_9, %c0_10] : memref<128x128xbf16, #tpu.memory_space<vmem>>, vector<128x128xbf16>
    %cst_11 = arith.constant dense<0.000000e+00> : vector<16x128xf32>
    %14 = tpu.matmul %12, %13, %cst_11 {dimension_numbers = #tpu.dot_dimension_numbers<[1], [0], [0], [1], [0, 0, 1, 1], [], []>} : vector<16x128xbf16>, vector<128x128xbf16>, vector<16x128xf32> -> vector<16x128xf32>
    %15 = arith.addf %11, %14 : vector<16x128xf32>
    %c0_12 = arith.constant 0 : index
    %c0_13 = arith.constant 0 : index
    %16 = vector.load %arg8[%c0_12, %c0_13] : memref<16x128xf32, #tpu.memory_space<vmem>>, vector<16x128xf32>
    tpu.vector_store %arg8[%c0_12, %c0_13], %15 {strides = array<i32>} : memref<16x128xf32, #tpu.memory_space<vmem>>, vector<16x128xf32>,
    %c0_i32_14 = arith.constant 0 : i32
    %17 = arith.cmpi eq, %arg1, %c0_i32_14 : i32
    %18 = arith.extui %17 : i1 to i32
    %c0_i32_15 = arith.constant 0 : i32
    %19 = arith.cmpi ne, %18, %c0_i32_15 : i32
    scf.if %19 {
      %c0_16 = arith.constant 0 : index
      %c0_17 = arith.constant 0 : index
      %20 = vector.load %arg8[%c0_16, %c0_17] : memref<16x128xf32, #tpu.memory_space<vmem>>, vector<16x128xf32>
      %c0_18 = arith.constant 0 : index
      %c0_19 = arith.constant 0 : index
      %21 = vector.load %arg6[%c0_18, %c0_19] : memref<1x128xf32, #tpu.memory_space<vmem>>, vector<1x128xf32>
      %22 = vector.broadcast %21 : vector<1x128xf32> to vector<16x128xf32>
      %23 = arith.addf %20, %22 : vector<16x128xf32>
      %c0_20 = arith.constant 0 : index
      %c0_21 = arith.constant 0 : index
      %24 = vector.load %arg7[%c0_20, %c0_21] : memref<16x128xf32, #tpu.memory_space<vmem>>, vector<16x128xf32>
      tpu.vector_store %arg7[%c0_20, %c0_21], %23 {strides = array<i32>} : memref<16x128xf32, #tpu.memory_space<vmem>>, vector<16x128xf32>,
    } else {
    }
    return
  }
  func.func @transform_0(%arg0: i32, %arg1: i32) -> (i32, i32) {
    %c0_i32 = arith.constant 0 : i32
    %c0_i32_0 = arith.constant 0 : i32
    return %arg0, %c0_i32 : i32, i32
  }
  func.func @transform_1(%arg0: i32, %arg1: i32) -> (i32, i32) {
    %c0_i32 = arith.constant 0 : i32
    %c0_i32_0 = arith.constant 0 : i32
    return %c0_i32, %arg1 : i32, i32
  }
  func.func @transform_2(%arg0: i32, %arg1: i32) -> (i32, i32) {
    %c0_i32 = arith.constant 0 : i32
    %c0_i32_0 = arith.constant 0 : i32
    return %c0_i32, %arg1 : i32, i32
  }
  func.func @transform_3(%arg0: i32, %arg1: i32) -> (i32, i32) {
    %c0_i32 = arith.constant 0 : i32
    %c0_i32_0 = arith.constant 0 : i32
    return %arg1, %c0_i32 : i32, i32
  }
  func.func @transform_4(%arg0: i32, %arg1: i32) -> (i32, i32) {
    %c0_i32 = arith.constant 0 : i32
    %c0_i32_0 = arith.constant 0 : i32
    %c0_i32_1 = arith.constant 0 : i32
    return %c0_i32, %c0_i32_0 : i32, i32
  }
  func.func @transform_5(%arg0: i32, %arg1: i32) -> (i32, i32) {
    %c0_i32 = arith.constant 0 : i32
    %c0_i32_0 = arith.constant 0 : i32
    return %arg0, %c0_i32 : i32, i32
  }
}

</mosaic_0001>

<llo_original>
// kernel: tpu_custom_call.1
$region0: #{tpu_custom_call.1}
  #allocation0 [shape = 'u32[]', space=smem, size = 0x4, offset = 0x4, fixed_abs, tag = 'smem constant byte address 0x4 - core index']
  #allocation1 [shape = 'u32[144,128]{1,0:T(1,128)}', space=vmem, size = 0x12000, scoped, tag = 'internal scratch']
  #allocation2 [shape = 'f32[16,128]{1,0:T(8,128)}', space=vmem, size = 0x2000, scoped, tag = 'scratch operand']
  %s0 = inlined_call_operand.hbm [shape: bf16[16,128], index: 0, kind: input, shape index: {}]
  %s1 = inlined_call_operand.hbm [shape: bf16[128,128], index: 1, kind: input, shape index: {}]
  %s2 = inlined_call_operand.vmem [shape: f32[1,128], index: 2, kind: input, shape index: {}]
  %s3 = inlined_call_operand.hbm [shape: bf16[128,128], index: 3, kind: input, shape index: {}]
  %s4 = inlined_call_operand.vmem [shape: f32[1,128], index: 4, kind: input, shape index: {}]
  %s5 = inlined_call_operand.hbm [shape: f32[16,128], index: 5, kind: output, shape index: {}]
  %s6 = sld [smem:[#allocation0]]
  $region50: #{tpu_custom_call.1} parent=0
    _
  %s8 = ssub.s32 1, %s6
  %s9 = scalar_select 0, %s8, %s6
  $region1: #{tpu_custom_call.1} parent=0
    #allocation3 [shape = 'u8[4096]{0}', space=vmem, size = 0x1000, scoped, tag = 'input window, operand 0, single buffered']
    #allocation4 [shape = 's32[1]{0}', space=sflag, size = 0x4, scoped, tag = 'scoped memory for tpu_custom_call.1']
    #allocation5 [shape = 's32[1]{0}', space=sflag, size = 0x4, scoped, tag = 'scoped memory for tpu_custom_call.1']
    #allocation6 [shape = 'u8[32768]{0}', space=vmem, size = 0x8000, scoped, tag = 'input window, operand 1, single buffered']
    #allocation7 [shape = 's32[1]{0}', space=sflag, size = 0x4, scoped, tag = 'scoped memory for tpu_custom_call.1']
    #allocation8 [shape = 'u8[32768]{0}', space=vmem, size = 0x8000, scoped, tag = 'input window, operand 3, single buffered']
    #allocation9 [shape = 'u8[8192]{0}', space=vmem, size = 0x2000, scoped, tag = 'output window, operand 0, single buffered']
    %10 = vsyncpa [#allocation4], 0
    %11 = vsyncpa [#allocation7], 0
    %12 = vsyncpa [#allocation5], 0
    // Predicated region
    $region2: #{tpu_custom_call.1} parent=1 // pred_check
      _
    $region3: #{tpu_custom_call.1} parent=1 // pred_check_branch
      %14 = sbr.rel (0) target = $region5
    $region4: #{tpu_custom_call.1} parent=1 // pred_region
      %s16 = ssub.s32 128, 128
      %17 = vsyncadd [#allocation4], %s16
      %s18 = sshll.u32 [#allocation3], 4
      %s19 = int_to_ptr.vmem [resolvable:$true] %s18
      %24 = dma.hbm_to_vmem [thread:$0]  %s0, 128, %s19, [#allocation4], 64, 64, 4
    $region5: #{tpu_custom_call.1} parent=1 // pred_fallthru
      _
    // Predicated region
    $region6: #{tpu_custom_call.1} parent=1 // pred_check
      _
    $region7: #{tpu_custom_call.1} parent=1 // pred_check_branch
      %26 = sbr.rel (0) target = $region9
    $region8: #{tpu_custom_call.1} parent=1 // pred_region
      %s28 = ssub.s32 1024, 1024
      %29 = vsyncadd [#allocation7], %s28
      %s30 = sshll.u32 [#allocation6], 4
      %s31 = int_to_ptr.vmem [resolvable:$true] %s30
      %36 = dma.hbm_to_vmem [thread:$0]  %s1, 1024, %s31, [#allocation7], 64, 64, 4
    $region9: #{tpu_custom_call.1} parent=1 // pred_fallthru
      _
    // Predicated region
    $region10: #{tpu_custom_call.1} parent=1 // pred_check
      _
    $region11: #{tpu_custom_call.1} parent=1 // pred_check_branch
      %38 = sbr.rel (0) target = $region13
    $region12: #{tpu_custom_call.1} parent=1 // pred_region
      _
    $region13: #{tpu_custom_call.1} parent=1 // pred_fallthru
      _
    // Predicated region
    $region14: #{tpu_custom_call.1} parent=1 // pred_check
      _
    $region15: #{tpu_custom_call.1} parent=1 // pred_check_branch
      %40 = sbr.rel (0) target = $region17
    $region16: #{tpu_custom_call.1} parent=1 // pred_region
      %s42 = ssub.s32 1024, 1024
      %43 = vsyncadd [#allocation7], %s42
      %s44 = sshll.u32 [#allocation8], 4
      %s45 = int_to_ptr.vmem [resolvable:$true] %s44
      %50 = dma.hbm_to_vmem [thread:$0]  %s3, 1024, %s45, [#allocation7], 64, 64, 4
    $region17: #{tpu_custom_call.1} parent=1 // pred_fallthru
      _
    // Predicated region
    $region18: #{tpu_custom_call.1} parent=1 // pred_check
      _
    $region19: #{tpu_custom_call.1} parent=1 // pred_check_branch
      %52 = sbr.rel (0) target = $region21
    $region20: #{tpu_custom_call.1} parent=1 // pred_region
      _
    $region21: #{tpu_custom_call.1} parent=1 // pred_fallthru
      _
    // Predicated region
    $region22: #{tpu_custom_call.1} parent=1 // pred_check
      _
    $region23: #{tpu_custom_call.1} parent=1 // pred_check_branch
      %54 = sbr.rel (0) target = $region25
    $region24: #{tpu_custom_call.1} parent=1 // pred_region
      %55 = dma.done [#allocation4], 128
    $region25: #{tpu_custom_call.1} parent=1 // pred_fallthru
      _
    // Predicated region
    $region26: #{tpu_custom_call.1} parent=1 // pred_check
      _
    $region27: #{tpu_custom_call.1} parent=1 // pred_check_branch
      %57 = sbr.rel (0) target = $region29
    $region28: #{tpu_custom_call.1} parent=1 // pred_region
      %58 = dma.done [#allocation7], 1024
    $region29: #{tpu_custom_call.1} parent=1 // pred_fallthru
      _
    // Predicated region
    $region30: #{tpu_custom_call.1} parent=1 // pred_check
      _
    $region31: #{tpu_custom_call.1} parent=1 // pred_check_branch
      %60 = sbr.rel (0) target = $region33
    $region32: #{tpu_custom_call.1} parent=1 // pred_region
      %61 = dma.done [#allocation7], 1024
    $region33: #{tpu_custom_call.1} parent=1 // pred_fallthru
      _
    %p63 = scmp.eq.s32.totalorder 0, 0
    // Predicated region
    $region34: #{tpu_custom_call.1} parent=1 // pred_check
      %p64 = pneg %p63
    $region35: #{tpu_custom_call.1} parent=1 // pred_check_branch
      %66 = sbr.rel (%p64) target = $region37
    $region36: #{tpu_custom_call.1} parent=1 // pred_region
      %67 = vst [vmem:[#allocation2] sm:$0xff] 0.0
      %68 = vst [vmem:[#allocation2 + $0x8] sm:$0xff] 0.0
    $region37: #{tpu_custom_call.1} parent=1 // pred_fallthru
      _
    %v69 = vld [vmem:[#allocation3] sm:$0xf]
    %v70 = vld [vmem:[#allocation3 + $0x4] sm:$0xf]
    %v71 = vld [vmem:[#allocation6] sm:$0xf]
    %v72 = vld [vmem:[#allocation6 + $0x4] sm:$0xf]
    %v73 = vld [vmem:[#allocation6 + $0x8] sm:$0xf]
    %v74 = vld [vmem:[#allocation6 + $0xc] sm:$0xf]
    %v75 = vld [vmem:[#allocation6 + $0x10] sm:$0xf]
    %v76 = vld [vmem:[#allocation6 + $0x14] sm:$0xf]
    %v77 = vld [vmem:[#allocation6 + $0x18] sm:$0xf]
    %v78 = vld [vmem:[#allocation6 + $0x1c] sm:$0xf]
    %v79 = vld [vmem:[#allocation6 + $0x20] sm:$0xf]
    %v80 = vld [vmem:[#allocation6 + $0x24] sm:$0xf]
    %v81 = vld [vmem:[#allocation6 + $0x28] sm:$0xf]
    %v82 = vld [vmem:[#allocation6 + $0x2c] sm:$0xf]
    %v83 = vld [vmem:[#allocation6 + $0x30] sm:$0xf]
    %v84 = vld [vmem:[#allocation6 + $0x34] sm:$0xf]
    %v85 = vld [vmem:[#allocation6 + $0x38] sm:$0xf]
    %v86 = vld [vmem:[#allocation6 + $0x3c] sm:$0xf]
    %v87 = vld [vmem:[%s2] sm:$0x1]
    %v89 = vlaneseq
    %v90 = vshrl.u32 %v89, 7
    %v91 = vsub.s32 0, %v90
    %v92 = vrot.slane %v87, %v91
    %v96 = vunpack.c.l.b16 %v69
    %v97 = vunpack.c.l.b16 %v70
    %v98 = vpack.c.b16 %v97, %v96
    %v116 = vunpack.c.l.b16 %v71
    %v117 = vunpack.c.l.b16 %v72
    %v118 = vunpack.c.l.b16 %v73
    %v119 = vunpack.c.l.b16 %v74
    %v120 = vunpack.c.l.b16 %v75
    %v121 = vunpack.c.l.b16 %v76
    %v122 = vunpack.c.l.b16 %v77
    %v123 = vunpack.c.l.b16 %v78
    %v124 = vunpack.c.l.b16 %v79
    %v125 = vunpack.c.l.b16 %v80
    %v126 = vunpack.c.l.b16 %v81
    %v127 = vunpack.c.l.b16 %v82
    %v128 = vunpack.c.l.b16 %v83
    %v129 = vunpack.c.l.b16 %v84
    %v130 = vunpack.c.l.b16 %v85
    %v131 = vunpack.c.l.b16 %v86
    %v132 = vpack.c.b16 %v117, %v116
    %v133 = vpack.c.b16 %v119, %v118
    %v134 = vpack.c.b16 %v121, %v120
    %v135 = vpack.c.b16 %v123, %v122
    %v136 = vpack.c.b16 %v125, %v124
    %v137 = vpack.c.b16 %v127, %v126
    %v138 = vpack.c.b16 %v129, %v128
    %v139 = vpack.c.b16 %v131, %v130
    %148 = vmatprep.subr.bf16.mxu0 0
    %149 = vmatpush1.bf16.msra.mxu0 %v139
    %150 = vmatprep.subr.bf16.mxu0 0
    %151 = vmatpush1.bf16.msra.mxu0 %v138
    %152 = vmatprep.subr.bf16.mxu0 0
    %153 = vmatpush1.bf16.msra.mxu0 %v137
    %154 = vmatprep.subr.bf16.mxu0 0
    %155 = vmatpush1.bf16.msra.mxu0 %v136
    %156 = vmatprep.subr.bf16.mxu0 0
    %157 = vmatpush1.bf16.msra.mxu0 %v135
    %158 = vmatprep.subr.bf16.mxu0 0
    %159 = vmatpush1.bf16.msra.mxu0 %v134
    %160 = vmatprep.subr.bf16.mxu0 0
    %161 = vmatpush1.bf16.msra.mxu0 %v133
    %162 = vmatprep.subr.bf16.mxu0 0
    %163 = vmatpush1.bf16.msra.mxu0 %v132
    %164 = vmatprep.subr.bf16.mxu0 0
    %165 = vmatpush2.bf16.msra.mxu0 0
    %166 = vmatprep.subr.bf16.mxu0 0
    %167 = vmatpush2.bf16.msra.mxu0 0
    %168 = vmatprep.subr.bf16.mxu0 0
    %169 = vmatpush2.bf16.msra.mxu0 0
    %170 = vmatprep.subr.bf16.mxu0 0
    %171 = vmatpush2.bf16.msra.mxu0 0
    %172 = vmatprep.subr.bf16.mxu0 0
    %173 = vmatpush2.bf16.msra.mxu0 0
    %174 = vmatprep.subr.bf16.mxu0 0
    %175 = vmatpush2.bf16.msra.mxu0 0
    %176 = vmatprep.subr.bf16.mxu0 0
    %177 = vmatpush2.bf16.msra.mxu0 0
    %178 = vmatprep.subr.bf16.mxu0 0
    %179 = vmatpush2.bf16.msra.mxu0 0
    %180 = vmatprep.mubr.bf16.mxu0 0
    %181 = vmatmul.mubr.bf16.gmra.mxu0 %v98
    %v182 = vpop.f32.mrf.mxu0
    %v183 = vadd.f32 %v92, %v182
    %v184 = vpop.f32.mrf.mxu0
    %v185 = vpop.f32.mrf.mxu0
    %v186 = vadd.f32 %v92, %v185
    %v187 = vpop.f32.mrf.mxu0
    %188 = vdwg.mxu0
    %v189 = vmax.f32 %v183, 0.0
    %v190 = vmax.f32 %v186, 0.0
    %v191 = vld [vmem:[#allocation2] sm:$0xff]
    %v192 = vld [vmem:[#allocation2 + $0x8] sm:$0xff]
    %v193 = vpack.c.bf16 %v190, %v189
    %v194 = vld [vmem:[#allocation8] sm:$0xf]
    %v195 = vld [vmem:[#allocation8 + $0x4] sm:$0xf]
    %v196 = vld [vmem:[#allocation8 + $0x8] sm:$0xf]
    %v197 = vld [vmem:[#allocation8 + $0xc] sm:$0xf]
    %v198 = vld [vmem:[#allocation8 + $0x10] sm:$0xf]
    %v199 = vld [vmem:[#allocation8 + $0x14] sm:$0xf]
    %v200 = vld [vmem:[#allocation8 + $0x18] sm:$0xf]
    %v201 = vld [vmem:[#allocation8 + $0x1c] sm:$0xf]
    %v202 = vld [vmem:[#allocation8 + $0x20] sm:$0xf]
    %v203 = vld [vmem:[#allocation8 + $0x24] sm:$0xf]
    %v204 = vld [vmem:[#allocation8 + $0x28] sm:$0xf]
    %v205 = vld [vmem:[#allocation8 + $0x2c] sm:$0xf]
    %v206 = vld [vmem:[#allocation8 + $0x30] sm:$0xf]
    %v207 = vld [vmem:[#allocation8 + $0x34] sm:$0xf]
    %v208 = vld [vmem:[#allocation8 + $0x38] sm:$0xf]
    %v209 = vld [vmem:[#allocation8 + $0x3c] sm:$0xf]
    %v226 = vunpack.c.l.b16 %v194
    %v227 = vunpack.c.l.b16 %v195
    %v228 = vunpack.c.l.b16 %v196
    %v229 = vunpack.c.l.b16 %v197
    %v230 = vunpack.c.l.b16 %v198
    %v231 = vunpack.c.l.b16 %v199
    %v232 = vunpack.c.l.b16 %v200
    %v233 = vunpack.c.l.b16 %v201
    %v234 = vunpack.c.l.b16 %v202
    %v235 = vunpack.c.l.b16 %v203
    %v236 = vunpack.c.l.b16 %v204
    %v237 = vunpack.c.l.b16 %v205
    %v238 = vunpack.c.l.b16 %v206
    %v239 = vunpack.c.l.b16 %v207
    %v240 = vunpack.c.l.b16 %v208
    %v241 = vunpack.c.l.b16 %v209
    %v242 = vpack.c.b16 %v227, %v226
    %v243 = vpack.c.b16 %v229, %v228
    %v244 = vpack.c.b16 %v231, %v230
    %v245 = vpack.c.b16 %v233, %v232
    %v246 = vpack.c.b16 %v235, %v234
    %v247 = vpack.c.b16 %v237, %v236
    %v248 = vpack.c.b16 %v239, %v238
    %v249 = vpack.c.b16 %v241, %v240
    %258 = vmatprep.subr.bf16.mxu0 0
    %259 = vmatpush1.bf16.msra.mxu0 %v249
    %260 = vmatprep.subr.bf16.mxu0 0
    %261 = vmatpush1.bf16.msra.mxu0 %v248
    %262 = vmatprep.subr.bf16.mxu0 0
    %263 = vmatpush1.bf16.msra.mxu0 %v247
    %264 = vmatprep.subr.bf16.mxu0 0
    %265 = vmatpush1.bf16.msra.mxu0 %v246
    %266 = vmatprep.subr.bf16.mxu0 0
    %267 = vmatpush1.bf16.msra.mxu0 %v245
    %268 = vmatprep.subr.bf16.mxu0 0
    %269 = vmatpush1.bf16.msra.mxu0 %v244
    %270 = vmatprep.subr.bf16.mxu0 0
    %271 = vmatpush1.bf16.msra.mxu0 %v243
    %272 = vmatprep.subr.bf16.mxu0 0
    %273 = vmatpush1.bf16.msra.mxu0 %v242
    %274 = vmatprep.subr.bf16.mxu0 0
    %275 = vmatpush2.bf16.msra.mxu0 0
    %276 = vmatprep.subr.bf16.mxu0 0
    %277 = vmatpush2.bf16.msra.mxu0 0
    %278 = vmatprep.subr.bf16.mxu0 0
    %279 = vmatpush2.bf16.msra.mxu0 0
    %280 = vmatprep.subr.bf16.mxu0 0
    %281 = vmatpush2.bf16.msra.mxu0 0
    %282 = vmatprep.subr.bf16.mxu0 0
    %283 = vmatpush2.bf16.msra.mxu0 0
    %284 = vmatprep.subr.bf16.mxu0 0
    %285 = vmatpush2.bf16.msra.mxu0 0
    %286 = vmatprep.subr.bf16.mxu0 0
    %287 = vmatpush2.bf16.msra.mxu0 0
    %288 = vmatprep.subr.bf16.mxu0 0
    %289 = vmatpush2.bf16.msra.mxu0 0
    %290 = vmatprep.mubr.bf16.mxu0 0
    %291 = vmatmul.mubr.bf16.gmra.mxu0 %v193
    %v292 = vpop.f32.mrf.mxu0
    %v293 = vadd.f32 0.0, %v292
    %v294 = vpop.f32.mrf.mxu0
    %v295 = vpop.f32.mrf.mxu0
    %v296 = vadd.f32 0.0, %v295
    %v297 = vpop.f32.mrf.mxu0
    %298 = vdwg.mxu0
    %v299 = vadd.f32 %v191, %v293
    %v300 = vadd.f32 %v192, %v296
    %301 = vst [vmem:[#allocation2] sm:$0xff] %v299
    %302 = vst [vmem:[#allocation2 + $0x8] sm:$0xff] %v300
    // Predicated region
    $region38: #{tpu_custom_call.1} parent=1 // pred_check
      %p303 = pneg %p63
    $region39: #{tpu_custom_call.1} parent=1 // pred_check_branch
      %305 = sbr.rel (%p303) target = $region41
    $region40: #{tpu_custom_call.1} parent=1 // pred_region
      %v306 = vld [vmem:[#allocation2] sm:$0xff]
      %v307 = vld [vmem:[#allocation2 + $0x8] sm:$0xff]
      %v308 = vld [vmem:[%s4] sm:$0x1]
      %v310 = vlaneseq
      %v311 = vshrl.u32 %v310, 7
      %v312 = vsub.s32 0, %v311
      %v313 = vrot.slane %v308, %v312
      %v315 = vadd.f32 %v306, %v313
      %v316 = vadd.f32 %v307, %v313
      %317 = vst [vmem:[#allocation9] sm:$0xff] %v315
      %318 = vst [vmem:[#allocation9 + $0x8] sm:$0xff] %v316
    $region41: #{tpu_custom_call.1} parent=1 // pred_fallthru
      _
    // Predicated region
    $region42: #{tpu_custom_call.1} parent=1 // pred_check
      _
    $region43: #{tpu_custom_call.1} parent=1 // pred_check_branch
      %320 = sbr.rel (0) target = $region45
    $region44: #{tpu_custom_call.1} parent=1 // pred_region
      %s322 = ssub.s32 256, 256
      %323 = vsyncadd [#allocation5], %s322
      %s324 = sshll.u32 [#allocation9], 4
      %s325 = int_to_ptr.vmem [resolvable:$true] %s324
      %330 = dma.vmem_to_hbm [thread:$0]  %s325, 256, %s5, [#allocation5], 128, 128, 8
    $region45: #{tpu_custom_call.1} parent=1 // pred_fallthru
      _
    // Predicated region
    $region46: #{tpu_custom_call.1} parent=1 // pred_check
      _
    $region47: #{tpu_custom_call.1} parent=1 // pred_check_branch
      %332 = sbr.rel (0) target = $region49
    $region48: #{tpu_custom_call.1} parent=1 // pred_region
      %333 = dma.done [#allocation5], 256
    $region49: #{tpu_custom_call.1} parent=1 // pred_fallthru
      _
    %334 = vsyncpa [#allocation4], 1
    %335 = vsyncpa [#allocation7], 1
    %336 = vsyncpa [#allocation5], 1

</llo_original>
